<compile_context>
chip_gen: v7x
topology: tpu7x:2x2x1
jax: 0.10.0
libtpu: 0.0.40
codegen_flags: <defaults>
</compile_context>

<pallas_src>
import jax
import jax.numpy as jnp
from jax.experimental import pallas as pl
from jax.experimental.pallas import tpu as pltpu

TM_MAX = 256  # cap on the row tile; keeps VMEM bounded for any batch size


def _round_up(x, m):
    return (x + m - 1) // m * m


def _embed_kernel(x_ref, y_ref, w1_ref, b1_ref, w2_ref, b2_ref, ox_ref, oy_ref):
    """Shared 2-layer MLP applied to one row-tile of x and of y.

    out = relu(a @ W1 + b1) @ W2 + b2  (bf16 MXU matmuls, f32 accumulation,
    f32 bias adds).  Weights are read once per step and stay VMEM-resident
    across grid steps (constant index_map).
    """
    w1 = w1_ref[...]                       # (D, H)     bf16
    b1 = b1_ref[...]                       # (1, H)     f32
    w2 = w2_ref[...]                       # (H, E_pad) bf16
    b2 = b2_ref[...]                       # (1, E_pad) f32

    def mlp(a_f32):
        a = a_f32.astype(jnp.bfloat16)                                   # cast in-kernel
        h = jnp.dot(a, w1, preferred_element_type=jnp.float32)           # (TM, H) f32
        h = jnp.maximum(h + b1, 0.0)
        o = jnp.dot(h.astype(jnp.bfloat16), w2,
                    preferred_element_type=jnp.float32)                  # (TM, E_pad) f32
        return o + b2

    ox_ref[...] = mlp(x_ref[...]).astype(ox_ref.dtype)
    oy_ref[...] = mlp(y_ref[...]).astype(oy_ref.dtype)


def embeddingnet_pair_pallas(x_flat, y_flat, w1, b1, w2, b2, *, tm):
    """x_flat, y_flat: (rows, D) f32 with rows % tm == 0.

    Weights use a constant index_map so they are fetched once and stay
    resident across grid steps.  TODO(synk): if W1 ever grows past a few MiB,
    tile K with an 'arbitrary' grid axis + f32 VMEM accumulator instead of
    relying on full residency.
    """
    rows, d = x_flat.shape
    hidden = w1.shape[1]
    e_pad = w2.shape[1]
    grid = (rows // tm,)

    # Advisory cost estimate (x and y each: 2*rows*(D*H + H*E_pad) flops).
    flops = 4 * rows * (d * hidden + hidden * e_pad)
    bytes_accessed = (
        2 * rows * d * 4                       # x_flat + y_flat (f32)
        + (d * hidden + hidden * e_pad) * 2    # bf16 weights
        + (hidden + e_pad) * 4                 # f32 biases
        + 2 * rows * e_pad * 4                 # two f32 outputs
    )

    return pl.pallas_call(
        _embed_kernel,
        out_shape=(
            jax.ShapeDtypeStruct((rows, e_pad), jnp.float32),
            jax.ShapeDtypeStruct((rows, e_pad), jnp.float32),
        ),
        grid_spec=pltpu.PrefetchScalarGridSpec(
            num_scalar_prefetch=0,
            grid=grid,
            in_specs=[
                pl.BlockSpec((tm, d), lambda i: (i, 0)),          # x tile (f32)
                pl.BlockSpec((tm, d), lambda i: (i, 0)),          # y tile (f32)
                pl.BlockSpec((d, hidden), lambda i: (0, 0)),      # W1 (resident)
                pl.BlockSpec((1, hidden), lambda i: (0, 0)),      # b1 (resident)
                pl.BlockSpec((hidden, e_pad), lambda i: (0, 0)),  # W2 (resident)
                pl.BlockSpec((1, e_pad), lambda i: (0, 0)),       # b2 (resident)
            ],
            out_specs=[
                pl.BlockSpec((tm, e_pad), lambda i: (i, 0)),      # feature_x tile
                pl.BlockSpec((tm, e_pad), lambda i: (i, 0)),      # feature_y tile
            ],
        ),
        compiler_params=pltpu.CompilerParams(
            # Row tiles are independent; harmless at grid=(1,), lets v7x's
            # two TensorCores split the work when there are multiple tiles.
            dimension_semantics=("parallel",),
        ),
        cost_estimate=pl.CostEstimate(
            flops=flops, transcendentals=0, bytes_accessed=bytes_accessed),
    )(x_flat, y_flat, w1, b1, w2, b2)


def mutual_net_forward(x, y, z, params):
    """MutualNet.forward: feature_x = embed(x); feature_y = embed(y); z unused."""
    del z  # MutualNet.forward ignores z entirely (matches PyTorch semantics)
    w1, b1, w2, b2 = params
    embed_dim = w2.shape[1]
    e_pad = _round_up(embed_dim, 128)          # lane-dense output inside the kernel

    n = x.shape[0]
    # Row tile: multiple of 16 (bf16 packed sublanes), capped so VMEM stays
    # bounded; rows padded to a multiple of the tile -> grid = rows // tm.
    tm = min(TM_MAX, _round_up(max(n, 1), 16))
    n_pad = _round_up(max(n, 1), tm)

    def flat_pad(inp):
        flat = inp.reshape(inp.shape[0], -1)                   # NCHW -> (N, D), f32
        return jnp.pad(flat, ((0, n_pad - inp.shape[0]), (0, 0)))

    x_flat = flat_pad(x)
    y_flat = flat_pad(y)

    # Zero-pad the output dimension of W2/b2 to 128 lanes (sliced off below).
    w2p = jnp.pad(w2, ((0, 0), (0, e_pad - embed_dim)))
    b2p = jnp.pad(b2, ((0, 0), (0, e_pad - embed_dim)))

    out_x, out_y = embeddingnet_pair_pallas(x_flat, y_flat, w1, b1, w2p, b2p, tm=tm)
    feature_x = out_x[:n, :embed_dim]
    feature_y = out_y[:n, :embed_dim]
    return feature_x, feature_y


def make_params(key, d_in, hidden, embed_dim):
    """Deterministic synthetic parameters for the shared embedding MLP (bf16 weights)."""
    k1, k2 = jax.random.split(key)
    w1 = (jax.random.normal(k1, (d_in, hidden), jnp.float32)
          * (1.0 / jnp.sqrt(d_in))).astype(jnp.bfloat16)
    b1 = jnp.zeros((1, hidden), jnp.float32)
    w2 = (jax.random.normal(k2, (hidden, embed_dim), jnp.float32)
          * (1.0 / jnp.sqrt(hidden))).astype(jnp.bfloat16)
    b2 = jnp.zeros((1, embed_dim), jnp.float32)
    return w1, b1, w2, b2


if __name__ == "__main__":
    # Small shapes consistent with an NCHW image-style embedding net.
    N, C, H, W = 2, 4, 16, 16
    D_IN = C * H * W           # 1024
    HIDDEN = 128
    EMBED = 32

    key = jax.random.PRNGKey(0)
    kx, ky, kz, kp = jax.random.split(key, 4)
    x = jax.random.normal(kx, (N, C, H, W), jnp.float32)
    y = jax.random.normal(ky, (N, C, H, W), jnp.float32)
    z = jax.random.normal(kz, (N, C, H, W), jnp.float32)   # unused by forward

    params = make_params(kp, D_IN, HIDDEN, EMBED)

    fwd = jax.jit(mutual_net_forward)
    fx, fy = fwd(x, y, z, params)
    jax.block_until_ready((fx, fy))

    # Pure-JAX reference with the same bf16-matmul / f32-accumulate recipe.
    def ref_embed(inp):
        w1, b1, w2, b2 = params
        flat = inp.reshape(inp.shape[0], -1).astype(jnp.bfloat16)
        h = jnp.maximum(
            jnp.dot(flat, w1, preferred_element_type=jnp.float32) + b1, 0.0)
        return jnp.dot(h.astype(jnp.bfloat16), w2,
                       preferred_element_type=jnp.float32) + b2

    assert fx.shape == (N, EMBED) and fy.shape == (N, EMBED)
    assert jnp.allclose(fx, ref_embed(x), atol=5e-2, rtol=5e-2)
    assert jnp.allclose(fy, ref_embed(y), atol=5e-2, rtol=5e-2)

    print("KERNEL_OK")
</pallas_src>

<mosaic_0001>
module attributes {stable_mosaic.version = 11 : i64} {
  func.func @_embed_kernel(%arg0: i32, %arg1: memref<16x1024xf32, #tpu.memory_space<vmem>>, %arg2: memref<16x1024xf32, #tpu.memory_space<vmem>>, %arg3: memref<1024x128xbf16, #tpu.memory_space<vmem>>, %arg4: memref<1x128xf32, #tpu.memory_space<vmem>>, %arg5: memref<128x128xbf16, #tpu.memory_space<vmem>>, %arg6: memref<1x128xf32, #tpu.memory_space<vmem>>, %arg7: memref<16x128xf32, #tpu.memory_space<vmem>>, %arg8: memref<16x128xf32, #tpu.memory_space<vmem>>) attributes {dimension_semantics = [#tpu.dimension_semantics<parallel>], iteration_bounds = array<i64: 1>, scalar_prefetch = 0 : i64, scratch_operands = 0 : i64, tpu.core_type = #tpu.core_type<tc>, window_params = [{transform_indices = @transform_0, window_bounds = array<i64: 16, 1024>}, {transform_indices = @transform_1, window_bounds = array<i64: 16, 1024>}, {pipeline_mode = #tpu.pipeline_mode<synchronous>, transform_indices = @transform_2, window_bounds = array<i64: 1024, 128>}, {pipeline_mode = #tpu.pipeline_mode<synchronous>, transform_indices = @transform_3, window_bounds = array<i64: 1, 128>}, {pipeline_mode = #tpu.pipeline_mode<synchronous>, transform_indices = @transform_4, window_bounds = array<i64: 128, 128>}, {pipeline_mode = #tpu.pipeline_mode<synchronous>, transform_indices = @transform_5, window_bounds = array<i64: 1, 128>}, {transform_indices = @transform_6, window_bounds = array<i64: 16, 128>}, {transform_indices = @transform_7, window_bounds = array<i64: 16, 128>}]} {
    %c0 = arith.constant 0 : index
    %c0_0 = arith.constant 0 : index
    %0 = vector.load %arg3[%c0, %c0_0] : memref<1024x128xbf16, #tpu.memory_space<vmem>>, vector<1024x128xbf16>
    %c0_1 = arith.constant 0 : index
    %c0_2 = arith.constant 0 : index
    %1 = vector.load %arg4[%c0_1, %c0_2] : memref<1x128xf32, #tpu.memory_space<vmem>>, vector<1x128xf32>
    %c0_3 = arith.constant 0 : index
    %c0_4 = arith.constant 0 : index
    %2 = vector.load %arg5[%c0_3, %c0_4] : memref<128x128xbf16, #tpu.memory_space<vmem>>, vector<128x128xbf16>
    %c0_5 = arith.constant 0 : index
    %c0_6 = arith.constant 0 : index
    %3 = vector.load %arg6[%c0_5, %c0_6] : memref<1x128xf32, #tpu.memory_space<vmem>>, vector<1x128xf32>
    %c0_7 = arith.constant 0 : index
    %c0_8 = arith.constant 0 : index
    %4 = vector.load %arg1[%c0_7, %c0_8] : memref<16x1024xf32, #tpu.memory_space<vmem>>, vector<16x1024xf32>
    %5 = arith.truncf %4 : vector<16x1024xf32> to vector<16x1024xbf16>
    %cst = arith.constant dense<0.000000e+00> : vector<16x128xf32>
    %6 = tpu.matmul %5, %0, %cst {dimension_numbers = #tpu.dot_dimension_numbers<[1], [0], [0], [1], [0, 0, 1, 1], [], []>} : vector<16x1024xbf16>, vector<1024x128xbf16>, vector<16x128xf32> -> vector<16x128xf32>
    %7 = vector.broadcast %1 : vector<1x128xf32> to vector<16x128xf32>
    %8 = arith.addf %6, %7 : vector<16x128xf32>
    %cst_9 = arith.constant 0.000000e+00 : f32
    %9 = vector.broadcast %cst_9 : f32 to vector<16x128xf32>
    %10 = arith.maximumf %8, %9 : vector<16x128xf32>
    %11 = arith.truncf %10 : vector<16x128xf32> to vector<16x128xbf16>
    %cst_10 = arith.constant dense<0.000000e+00> : vector<16x128xf32>
    %12 = tpu.matmul %11, %2, %cst_10 {dimension_numbers = #tpu.dot_dimension_numbers<[1], [0], [0], [1], [0, 0, 1, 1], [], []>} : vector<16x128xbf16>, vector<128x128xbf16>, vector<16x128xf32> -> vector<16x128xf32>
    %13 = vector.broadcast %3 : vector<1x128xf32> to vector<16x128xf32>
    %14 = arith.addf %12, %13 : vector<16x128xf32>
    %c0_11 = arith.constant 0 : index
    %c0_12 = arith.constant 0 : index
    %15 = vector.load %arg7[%c0_11, %c0_12] : memref<16x128xf32, #tpu.memory_space<vmem>>, vector<16x128xf32>
    tpu.vector_store %arg7[%c0_11, %c0_12], %14 {strides = array<i32>} : memref<16x128xf32, #tpu.memory_space<vmem>>, vector<16x128xf32>,
    %c0_13 = arith.constant 0 : index
    %c0_14 = arith.constant 0 : index
    %16 = vector.load %arg2[%c0_13, %c0_14] : memref<16x1024xf32, #tpu.memory_space<vmem>>, vector<16x1024xf32>
    %17 = arith.truncf %16 : vector<16x1024xf32> to vector<16x1024xbf16>
    %cst_15 = arith.constant dense<0.000000e+00> : vector<16x128xf32>
    %18 = tpu.matmul %17, %0, %cst_15 {dimension_numbers = #tpu.dot_dimension_numbers<[1], [0], [0], [1], [0, 0, 1, 1], [], []>} : vector<16x1024xbf16>, vector<1024x128xbf16>, vector<16x128xf32> -> vector<16x128xf32>
    %19 = vector.broadcast %1 : vector<1x128xf32> to vector<16x128xf32>
    %20 = arith.addf %18, %19 : vector<16x128xf32>
    %cst_16 = arith.constant 0.000000e+00 : f32
    %21 = vector.broadcast %cst_16 : f32 to vector<16x128xf32>
    %22 = arith.maximumf %20, %21 : vector<16x128xf32>
    %23 = arith.truncf %22 : vector<16x128xf32> to vector<16x128xbf16>
    %cst_17 = arith.constant dense<0.000000e+00> : vector<16x128xf32>
    %24 = tpu.matmul %23, %2, %cst_17 {dimension_numbers = #tpu.dot_dimension_numbers<[1], [0], [0], [1], [0, 0, 1, 1], [], []>} : vector<16x128xbf16>, vector<128x128xbf16>, vector<16x128xf32> -> vector<16x128xf32>
    %25 = vector.broadcast %3 : vector<1x128xf32> to vector<16x128xf32>
    %26 = arith.addf %24, %25 : vector<16x128xf32>
    %c0_18 = arith.constant 0 : index
    %c0_19 = arith.constant 0 : index
    %27 = vector.load %arg8[%c0_18, %c0_19] : memref<16x128xf32, #tpu.memory_space<vmem>>, vector<16x128xf32>
    tpu.vector_store %arg8[%c0_18, %c0_19], %26 {strides = array<i32>} : memref<16x128xf32, #tpu.memory_space<vmem>>, vector<16x128xf32>,
    return
  }
  func.func @transform_0(%arg0: i32) -> (i32, i32) {
    %c0_i32 = arith.constant 0 : i32
    %c0_i32_0 = arith.constant 0 : i32
    return %arg0, %c0_i32 : i32, i32
  }
  func.func @transform_1(%arg0: i32) -> (i32, i32) {
    %c0_i32 = arith.constant 0 : i32
    %c0_i32_0 = arith.constant 0 : i32
    return %arg0, %c0_i32 : i32, i32
  }
  func.func @transform_2(%arg0: i32) -> (i32, i32) {
    %c0_i32 = arith.constant 0 : i32
    %c0_i32_0 = arith.constant 0 : i32
    %c0_i32_1 = arith.constant 0 : i32
    return %c0_i32, %c0_i32_0 : i32, i32
  }
  func.func @transform_3(%arg0: i32) -> (i32, i32) {
    %c0_i32 = arith.constant 0 : i32
    %c0_i32_0 = arith.constant 0 : i32
    %c0_i32_1 = arith.constant 0 : i32
    return %c0_i32, %c0_i32_0 : i32, i32
  }
  func.func @transform_4(%arg0: i32) -> (i32, i32) {
    %c0_i32 = arith.constant 0 : i32
    %c0_i32_0 = arith.constant 0 : i32
    %c0_i32_1 = arith.constant 0 : i32
    return %c0_i32, %c0_i32_0 : i32, i32
  }
  func.func @transform_5(%arg0: i32) -> (i32, i32) {
    %c0_i32 = arith.constant 0 : i32
    %c0_i32_0 = arith.constant 0 : i32
    %c0_i32_1 = arith.constant 0 : i32
    return %c0_i32, %c0_i32_0 : i32, i32
  }
  func.func @transform_6(%arg0: i32) -> (i32, i32) {
    %c0_i32 = arith.constant 0 : i32
    %c0_i32_0 = arith.constant 0 : i32
    return %arg0, %c0_i32 : i32, i32
  }
  func.func @transform_7(%arg0: i32) -> (i32, i32) {
    %c0_i32 = arith.constant 0 : i32
    %c0_i32_0 = arith.constant 0 : i32
    return %arg0, %c0_i32 : i32, i32
  }
}

</mosaic_0001>

<llo_original>
// kernel: mutual_net_forward.1
$region0: #{mutual_net_forward.1}
  #allocation0 [shape = 'u32[]', space=smem, size = 0x4, offset = 0x4, fixed_abs, tag = 'smem constant byte address 0x4 - core index']
  #allocation1 [shape = 'u32[144,128]{1,0:T(1,128)}', space=vmem, size = 0x12000, scoped, tag = 'internal scratch']
  %s0 = inlined_call_operand.vmem [shape: f32[16,1024], index: 0, kind: input, shape index: {}]
  %s1 = inlined_call_operand.vmem [shape: f32[16,1024], index: 1, kind: input, shape index: {}]
  %s2 = inlined_call_operand.vmem [shape: bf16[1024,128], index: 2, kind: input, shape index: {}]
  %s3 = inlined_call_operand.vmem [shape: f32[1,128], index: 3, kind: input, shape index: {}]
  %s4 = inlined_call_operand.vmem [shape: bf16[128,128], index: 4, kind: input, shape index: {}]
  %s5 = inlined_call_operand.vmem [shape: f32[1,128], index: 5, kind: input, shape index: {}]
  %s6 = inlined_call_operand.vmem [shape: f32[16,128], index: 6, kind: output, shape index: {0}]
  %s7 = inlined_call_operand.vmem [shape: f32[16,128], index: 7, kind: output, shape index: {1}]
  %8 = xla_tuple %s6, %s7
  %s9 = sld [smem:[#allocation0]]
  $region42: #{mutual_net_forward.1} parent=0
    _
  %s11 = ssub.s32 1, %s9
  %s12 = scalar_select 0, %s11, %s9
  // Predicated region
  $region2: #{mutual_net_forward.1} parent=0 // pred_check
    _
  $region3: #{mutual_net_forward.1} parent=0 // pred_check_branch
    %14 = sbr.rel (0) target = $region5
  $region4: #{mutual_net_forward.1} parent=0 // pred_region
    _
  $region5: #{mutual_net_forward.1} parent=0 // pred_fallthru
    _
  // Predicated region
  $region6: #{mutual_net_forward.1} parent=0 // pred_check
    _
  $region7: #{mutual_net_forward.1} parent=0 // pred_check_branch
    %16 = sbr.rel (0) target = $region9
  $region8: #{mutual_net_forward.1} parent=0 // pred_region
    _
  $region9: #{mutual_net_forward.1} parent=0 // pred_fallthru
    _
  // Predicated region
  $region10: #{mutual_net_forward.1} parent=0 // pred_check
    _
  $region11: #{mutual_net_forward.1} parent=0 // pred_check_branch
    %18 = sbr.rel (0) target = $region13
  $region12: #{mutual_net_forward.1} parent=0 // pred_region
    _
  $region13: #{mutual_net_forward.1} parent=0 // pred_fallthru
    _
  // Predicated region
  $region14: #{mutual_net_forward.1} parent=0 // pred_check
    _
  $region15: #{mutual_net_forward.1} parent=0 // pred_check_branch
    %20 = sbr.rel (0) target = $region17
  $region16: #{mutual_net_forward.1} parent=0 // pred_region
    _
  $region17: #{mutual_net_forward.1} parent=0 // pred_fallthru
    _
  // Predicated region
  $region18: #{mutual_net_forward.1} parent=0 // pred_check
    _
  $region19: #{mutual_net_forward.1} parent=0 // pred_check_branch
    %22 = sbr.rel (0) target = $region21
  $region20: #{mutual_net_forward.1} parent=0 // pred_region
    _
  $region21: #{mutual_net_forward.1} parent=0 // pred_fallthru
    _
  // Predicated region
  $region22: #{mutual_net_forward.1} parent=0 // pred_check
    _
  $region23: #{mutual_net_forward.1} parent=0 // pred_check_branch
    %24 = sbr.rel (0) target = $region25
  $region24: #{mutual_net_forward.1} parent=0 // pred_region
    _
  $region25: #{mutual_net_forward.1} parent=0 // pred_fallthru
    _
  %v26 = vld [vmem:[%s2] sm:$0xf]
  %v27 = vld [vmem:[%s2 + $0x4] sm:$0xf]
  %v28 = vld [vmem:[%s2 + $0x8] sm:$0xf]
  %v29 = vld [vmem:[%s2 + $0xc] sm:$0xf]
  %v30 = vld [vmem:[%s2 + $0x10] sm:$0xf]
  %v31 = vld [vmem:[%s2 + $0x14] sm:$0xf]
  %v32 = vld [vmem:[%s2 + $0x18] sm:$0xf]
  %v33 = vld [vmem:[%s2 + $0x1c] sm:$0xf]
  %v34 = vld [vmem:[%s2 + $0x20] sm:$0xf]
  %v35 = vld [vmem:[%s2 + $0x24] sm:$0xf]
  %v36 = vld [vmem:[%s2 + $0x28] sm:$0xf]
  %v37 = vld [vmem:[%s2 + $0x2c] sm:$0xf]
  %v38 = vld [vmem:[%s2 + $0x30] sm:$0xf]
  %v39 = vld [vmem:[%s2 + $0x34] sm:$0xf]
  %v40 = vld [vmem:[%s2 + $0x38] sm:$0xf]
  %v41 = vld [vmem:[%s2 + $0x3c] sm:$0xf]
  %v42 = vld [vmem:[%s2 + $0x40] sm:$0xf]
  %v43 = vld [vmem:[%s2 + $0x44] sm:$0xf]
  %v44 = vld [vmem:[%s2 + $0x48] sm:$0xf]
  %v45 = vld [vmem:[%s2 + $0x4c] sm:$0xf]
  %v46 = vld [vmem:[%s2 + $0x50] sm:$0xf]
  %v47 = vld [vmem:[%s2 + $0x54] sm:$0xf]
  %v48 = vld [vmem:[%s2 + $0x58] sm:$0xf]
  %v49 = vld [vmem:[%s2 + $0x5c] sm:$0xf]
  %v50 = vld [vmem:[%s2 + $0x60] sm:$0xf]
  %v51 = vld [vmem:[%s2 + $0x64] sm:$0xf]
  %v52 = vld [vmem:[%s2 + $0x68] sm:$0xf]
  %v53 = vld [vmem:[%s2 + $0x6c] sm:$0xf]
  %v54 = vld [vmem:[%s2 + $0x70] sm:$0xf]
  %v55 = vld [vmem:[%s2 + $0x74] sm:$0xf]
  %v56 = vld [vmem:[%s2 + $0x78] sm:$0xf]
  %v57 = vld [vmem:[%s2 + $0x7c] sm:$0xf]
  %v58 = vld [vmem:[%s2 + $0x80] sm:$0xf]
  %v59 = vld [vmem:[%s2 + $0x84] sm:$0xf]
  %v60 = vld [vmem:[%s2 + $0x88] sm:$0xf]
  %v61 = vld [vmem:[%s2 + $0x8c] sm:$0xf]
  %v62 = vld [vmem:[%s2 + $0x90] sm:$0xf]
  %v63 = vld [vmem:[%s2 + $0x94] sm:$0xf]
  %v64 = vld [vmem:[%s2 + $0x98] sm:$0xf]
  %v65 = vld [vmem:[%s2 + $0x9c] sm:$0xf]
  %v66 = vld [vmem:[%s2 + $0xa0] sm:$0xf]
  %v67 = vld [vmem:[%s2 + $0xa4] sm:$0xf]
  %v68 = vld [vmem:[%s2 + $0xa8] sm:$0xf]
  %v69 = vld [vmem:[%s2 + $0xac] sm:$0xf]
  %v70 = vld [vmem:[%s2 + $0xb0] sm:$0xf]
  %v71 = vld [vmem:[%s2 + $0xb4] sm:$0xf]
  %v72 = vld [vmem:[%s2 + $0xb8] sm:$0xf]
  %v73 = vld [vmem:[%s2 + $0xbc] sm:$0xf]
  %v74 = vld [vmem:[%s2 + $0xc0] sm:$0xf]
  %v75 = vld [vmem:[%s2 + $0xc4] sm:$0xf]
  %v76 = vld [vmem:[%s2 + $0xc8] sm:$0xf]
  %v77 = vld [vmem:[%s2 + $0xcc] sm:$0xf]
  %v78 = vld [vmem:[%s2 + $0xd0] sm:$0xf]
  %v79 = vld [vmem:[%s2 + $0xd4] sm:$0xf]
  %v80 = vld [vmem:[%s2 + $0xd8] sm:$0xf]
  %v81 = vld [vmem:[%s2 + $0xdc] sm:$0xf]
  %v82 = vld [vmem:[%s2 + $0xe0] sm:$0xf]
  %v83 = vld [vmem:[%s2 + $0xe4] sm:$0xf]
  %v84 = vld [vmem:[%s2 + $0xe8] sm:$0xf]
  %v85 = vld [vmem:[%s2 + $0xec] sm:$0xf]
  %v86 = vld [vmem:[%s2 + $0xf0] sm:$0xf]
  %v87 = vld [vmem:[%s2 + $0xf4] sm:$0xf]
  %v88 = vld [vmem:[%s2 + $0xf8] sm:$0xf]
  %v89 = vld [vmem:[%s2 + $0xfc] sm:$0xf]
  %v90 = vld [vmem:[%s2 + $0x100] sm:$0xf]
  %v91 = vld [vmem:[%s2 + $0x104] sm:$0xf]
  %v92 = vld [vmem:[%s2 + $0x108] sm:$0xf]
  %v93 = vld [vmem:[%s2 + $0x10c] sm:$0xf]
  %v94 = vld [vmem:[%s2 + $0x110] sm:$0xf]
  %v95 = vld [vmem:[%s2 + $0x114] sm:$0xf]
  %v96 = vld [vmem:[%s2 + $0x118] sm:$0xf]
  %v97 = vld [vmem:[%s2 + $0x11c] sm:$0xf]
  %v98 = vld [vmem:[%s2 + $0x120] sm:$0xf]
  %v99 = vld [vmem:[%s2 + $0x124] sm:$0xf]
  %v100 = vld [vmem:[%s2 + $0x128] sm:$0xf]
  %v101 = vld [vmem:[%s2 + $0x12c] sm:$0xf]
  %v102 = vld [vmem:[%s2 + $0x130] sm:$0xf]
  %v103 = vld [vmem:[%s2 + $0x134] sm:$0xf]
  %v104 = vld [vmem:[%s2 + $0x138] sm:$0xf]
  %v105 = vld [vmem:[%s2 + $0x13c] sm:$0xf]
  %v106 = vld [vmem:[%s2 + $0x140] sm:$0xf]
  %v107 = vld [vmem:[%s2 + $0x144] sm:$0xf]
  %v108 = vld [vmem:[%s2 + $0x148] sm:$0xf]
  %v109 = vld [vmem:[%s2 + $0x14c] sm:$0xf]
  %v110 = vld [vmem:[%s2 + $0x150] sm:$0xf]
  %v111 = vld [vmem:[%s2 + $0x154] sm:$0xf]
  %v112 = vld [vmem:[%s2 + $0x158] sm:$0xf]
  %v113 = vld [vmem:[%s2 + $0x15c] sm:$0xf]
  %v114 = vld [vmem:[%s2 + $0x160] sm:$0xf]
  %v115 = vld [vmem:[%s2 + $0x164] sm:$0xf]
  %v116 = vld [vmem:[%s2 + $0x168] sm:$0xf]
  %v117 = vld [vmem:[%s2 + $0x16c] sm:$0xf]
  %v118 = vld [vmem:[%s2 + $0x170] sm:$0xf]
  %v119 = vld [vmem:[%s2 + $0x174] sm:$0xf]
  %v120 = vld [vmem:[%s2 + $0x178] sm:$0xf]
  %v121 = vld [vmem:[%s2 + $0x17c] sm:$0xf]
  %v122 = vld [vmem:[%s2 + $0x180] sm:$0xf]
  %v123 = vld [vmem:[%s2 + $0x184] sm:$0xf]
  %v124 = vld [vmem:[%s2 + $0x188] sm:$0xf]
  %v125 = vld [vmem:[%s2 + $0x18c] sm:$0xf]
  %v126 = vld [vmem:[%s2 + $0x190] sm:$0xf]
  %v127 = vld [vmem:[%s2 + $0x194] sm:$0xf]
  %v128 = vld [vmem:[%s2 + $0x198] sm:$0xf]
  %v129 = vld [vmem:[%s2 + $0x19c] sm:$0xf]
  %v130 = vld [vmem:[%s2 + $0x1a0] sm:$0xf]
  %v131 = vld [vmem:[%s2 + $0x1a4] sm:$0xf]
  %v132 = vld [vmem:[%s2 + $0x1a8] sm:$0xf]
  %v133 = vld [vmem:[%s2 + $0x1ac] sm:$0xf]
  %v134 = vld [vmem:[%s2 + $0x1b0] sm:$0xf]
  %v135 = vld [vmem:[%s2 + $0x1b4] sm:$0xf]
  %v136 = vld [vmem:[%s2 + $0x1b8] sm:$0xf]
  %v137 = vld [vmem:[%s2 + $0x1bc] sm:$0xf]
  %v138 = vld [vmem:[%s2 + $0x1c0] sm:$0xf]
  %v139 = vld [vmem:[%s2 + $0x1c4] sm:$0xf]
  %v140 = vld [vmem:[%s2 + $0x1c8] sm:$0xf]
  %v141 = vld [vmem:[%s2 + $0x1cc] sm:$0xf]
  %v142 = vld [vmem:[%s2 + $0x1d0] sm:$0xf]
  %v143 = vld [vmem:[%s2 + $0x1d4] sm:$0xf]
  %v144 = vld [vmem:[%s2 + $0x1d8] sm:$0xf]
  %v145 = vld [vmem:[%s2 + $0x1dc] sm:$0xf]
  %v146 = vld [vmem:[%s2 + $0x1e0] sm:$0xf]
  %v147 = vld [vmem:[%s2 + $0x1e4] sm:$0xf]
  %v148 = vld [vmem:[%s2 + $0x1e8] sm:$0xf]
  %v149 = vld [vmem:[%s2 + $0x1ec] sm:$0xf]
  %v150 = vld [vmem:[%s2 + $0x1f0] sm:$0xf]
  %v151 = vld [vmem:[%s2 + $0x1f4] sm:$0xf]
  %v152 = vld [vmem:[%s2 + $0x1f8] sm:$0xf]
  %v153 = vld [vmem:[%s2 + $0x1fc] sm:$0xf]
  %v154 = vld [vmem:[%s3] sm:$0x1]
  %v155 = vld [vmem:[%s4] sm:$0xf]
  %v156 = vld [vmem:[%s4 + $0x4] sm:$0xf]
  %v157 = vld [vmem:[%s4 + $0x8] sm:$0xf]
  %v158 = vld [vmem:[%s4 + $0xc] sm:$0xf]
  %v159 = vld [vmem:[%s4 + $0x10] sm:$0xf]
  %v160 = vld [vmem:[%s4 + $0x14] sm:$0xf]
  %v161 = vld [vmem:[%s4 + $0x18] sm:$0xf]
  %v162 = vld [vmem:[%s4 + $0x1c] sm:$0xf]
  %v163 = vld [vmem:[%s4 + $0x20] sm:$0xf]
  %v164 = vld [vmem:[%s4 + $0x24] sm:$0xf]
  %v165 = vld [vmem:[%s4 + $0x28] sm:$0xf]
  %v166 = vld [vmem:[%s4 + $0x2c] sm:$0xf]
  %v167 = vld [vmem:[%s4 + $0x30] sm:$0xf]
  %v168 = vld [vmem:[%s4 + $0x34] sm:$0xf]
  %v169 = vld [vmem:[%s4 + $0x38] sm:$0xf]
  %v170 = vld [vmem:[%s4 + $0x3c] sm:$0xf]
  %v171 = vld [vmem:[%s5] sm:$0x1]
  %v172 = vld [vmem:[%s0] sm:$0xff]
  %v173 = vld [vmem:[%s0 + $0x8] sm:$0xff]
  %v174 = vld [vmem:[%s0 + $0x10] sm:$0xff]
  %v175 = vld [vmem:[%s0 + $0x18] sm:$0xff]
  %v176 = vld [vmem:[%s0 + $0x20] sm:$0xff]
  %v177 = vld [vmem:[%s0 + $0x28] sm:$0xff]
  %v178 = vld [vmem:[%s0 + $0x30] sm:$0xff]
  %v179 = vld [vmem:[%s0 + $0x38] sm:$0xff]
  %v180 = vld [vmem:[%s0 + $0x40] sm:$0xff]
  %v181 = vld [vmem:[%s0 + $0x48] sm:$0xff]
  %v182 = vld [vmem:[%s0 + $0x50] sm:$0xff]
  %v183 = vld [vmem:[%s0 + $0x58] sm:$0xff]
  %v184 = vld [vmem:[%s0 + $0x60] sm:$0xff]
  %v185 = vld [vmem:[%s0 + $0x68] sm:$0xff]
  %v186 = vld [vmem:[%s0 + $0x70] sm:$0xff]
  %v187 = vld [vmem:[%s0 + $0x78] sm:$0xff]
  %v188 = vpack.c.bf16 %v180, %v172
  %v189 = vpack.c.bf16 %v181, %v173
  %v190 = vpack.c.bf16 %v182, %v174
  %v191 = vpack.c.bf16 %v183, %v175
  %v192 = vpack.c.bf16 %v184, %v176
  %v193 = vpack.c.bf16 %v185, %v177
  %v194 = vpack.c.bf16 %v186, %v178
  %v195 = vpack.c.bf16 %v187, %v179
  %v197 = vlaneseq
  %v198 = vshrl.u32 %v197, 7
  %v199 = vsub.s32 0, %v198
  %v200 = vrot.slane %v154, %v199
  %v330 = vunpack.c.l.b16 %v26
  %v331 = vunpack.c.l.b16 %v27
  %v332 = vunpack.c.l.b16 %v28
  %v333 = vunpack.c.l.b16 %v29
  %v334 = vunpack.c.l.b16 %v30
  %v335 = vunpack.c.l.b16 %v31
  %v336 = vunpack.c.l.b16 %v32
  %v337 = vunpack.c.l.b16 %v33
  %v338 = vunpack.c.l.b16 %v34
  %v339 = vunpack.c.l.b16 %v35
  %v340 = vunpack.c.l.b16 %v36
  %v341 = vunpack.c.l.b16 %v37
  %v342 = vunpack.c.l.b16 %v38
  %v343 = vunpack.c.l.b16 %v39
  %v344 = vunpack.c.l.b16 %v40
  %v345 = vunpack.c.l.b16 %v41
  %v346 = vunpack.c.l.b16 %v42
  %v347 = vunpack.c.l.b16 %v43
  %v348 = vunpack.c.l.b16 %v44
  %v349 = vunpack.c.l.b16 %v45
  %v350 = vunpack.c.l.b16 %v46
  %v351 = vunpack.c.l.b16 %v47
  %v352 = vunpack.c.l.b16 %v48
  %v353 = vunpack.c.l.b16 %v49
  %v354 = vunpack.c.l.b16 %v50
  %v355 = vunpack.c.l.b16 %v51
  %v356 = vunpack.c.l.b16 %v52
  %v357 = vunpack.c.l.b16 %v53
  %v358 = vunpack.c.l.b16 %v54
  %v359 = vunpack.c.l.b16 %v55
  %v360 = vunpack.c.l.b16 %v56
  %v361 = vunpack.c.l.b16 %v57
  %v362 = vunpack.c.l.b16 %v58
  %v363 = vunpack.c.l.b16 %v59
  %v364 = vunpack.c.l.b16 %v60
  %v365 = vunpack.c.l.b16 %v61
  %v366 = vunpack.c.l.b16 %v62
  %v367 = vunpack.c.l.b16 %v63
  %v368 = vunpack.c.l.b16 %v64
  %v369 = vunpack.c.l.b16 %v65
  %v370 = vunpack.c.l.b16 %v66
  %v371 = vunpack.c.l.b16 %v67
  %v372 = vunpack.c.l.b16 %v68
  %v373 = vunpack.c.l.b16 %v69
  %v374 = vunpack.c.l.b16 %v70
  %v375 = vunpack.c.l.b16 %v71
  %v376 = vunpack.c.l.b16 %v72
  %v377 = vunpack.c.l.b16 %v73
  %v378 = vunpack.c.l.b16 %v74
  %v379 = vunpack.c.l.b16 %v75
  %v380 = vunpack.c.l.b16 %v76
  %v381 = vunpack.c.l.b16 %v77
  %v382 = vunpack.c.l.b16 %v78
  %v383 = vunpack.c.l.b16 %v79
  %v384 = vunpack.c.l.b16 %v80
  %v385 = vunpack.c.l.b16 %v81
  %v386 = vunpack.c.l.b16 %v82
  %v387 = vunpack.c.l.b16 %v83
  %v388 = vunpack.c.l.b16 %v84
  %v389 = vunpack.c.l.b16 %v85
  %v390 = vunpack.c.l.b16 %v86
  %v391 = vunpack.c.l.b16 %v87
  %v392 = vunpack.c.l.b16 %v88
  %v393 = vunpack.c.l.b16 %v89
  %v394 = vunpack.c.l.b16 %v90
  %v395 = vunpack.c.l.b16 %v91
  %v396 = vunpack.c.l.b16 %v92
  %v397 = vunpack.c.l.b16 %v93
  %v398 = vunpack.c.l.b16 %v94
  %v399 = vunpack.c.l.b16 %v95
  %v400 = vunpack.c.l.b16 %v96
  %v401 = vunpack.c.l.b16 %v97
  %v402 = vunpack.c.l.b16 %v98
  %v403 = vunpack.c.l.b16 %v99
  %v404 = vunpack.c.l.b16 %v100
  %v405 = vunpack.c.l.b16 %v101
  %v406 = vunpack.c.l.b16 %v102
  %v407 = vunpack.c.l.b16 %v103
  %v408 = vunpack.c.l.b16 %v104
  %v409 = vunpack.c.l.b16 %v105
  %v410 = vunpack.c.l.b16 %v106
  %v411 = vunpack.c.l.b16 %v107
  %v412 = vunpack.c.l.b16 %v108
  %v413 = vunpack.c.l.b16 %v109
  %v414 = vunpack.c.l.b16 %v110
  %v415 = vunpack.c.l.b16 %v111
  %v416 = vunpack.c.l.b16 %v112
  %v417 = vunpack.c.l.b16 %v113
  %v418 = vunpack.c.l.b16 %v114
  %v419 = vunpack.c.l.b16 %v115
  %v420 = vunpack.c.l.b16 %v116
  %v421 = vunpack.c.l.b16 %v117
  %v422 = vunpack.c.l.b16 %v118
  %v423 = vunpack.c.l.b16 %v119
  %v424 = vunpack.c.l.b16 %v120
  %v425 = vunpack.c.l.b16 %v121
  %v426 = vunpack.c.l.b16 %v122
  %v427 = vunpack.c.l.b16 %v123
  %v428 = vunpack.c.l.b16 %v124
  %v429 = vunpack.c.l.b16 %v125
  %v430 = vunpack.c.l.b16 %v126
  %v431 = vunpack.c.l.b16 %v127
  %v432 = vunpack.c.l.b16 %v128
  %v433 = vunpack.c.l.b16 %v129
  %v434 = vunpack.c.l.b16 %v130
  %v435 = vunpack.c.l.b16 %v131
  %v436 = vunpack.c.l.b16 %v132
  %v437 = vunpack.c.l.b16 %v133
  %v438 = vunpack.c.l.b16 %v134
  %v439 = vunpack.c.l.b16 %v135
  %v440 = vunpack.c.l.b16 %v136
  %v441 = vunpack.c.l.b16 %v137
  %v442 = vunpack.c.l.b16 %v138
  %v443 = vunpack.c.l.b16 %v139
  %v444 = vunpack.c.l.b16 %v140
  %v445 = vunpack.c.l.b16 %v141
  %v446 = vunpack.c.l.b16 %v142
  %v447 = vunpack.c.l.b16 %v143
  %v448 = vunpack.c.l.b16 %v144
  %v449 = vunpack.c.l.b16 %v145
  %v450 = vunpack.c.l.b16 %v146
  %v451 = vunpack.c.l.b16 %v147
  %v452 = vunpack.c.l.b16 %v148
  %v453 = vunpack.c.l.b16 %v149
  %v454 = vunpack.c.l.b16 %v150
  %v455 = vunpack.c.l.b16 %v151
  %v456 = vunpack.c.l.b16 %v152
  %v457 = vunpack.c.l.b16 %v153
  %v458 = vpack.c.b16 %v331, %v330
  %v459 = vpack.c.b16 %v333, %v332
  %v460 = vpack.c.b16 %v335, %v334
  %v461 = vpack.c.b16 %v337, %v336
  %v462 = vpack.c.b16 %v339, %v338
  %v463 = vpack.c.b16 %v341, %v340
  %v464 = vpack.c.b16 %v343, %v342
  %v465 = vpack.c.b16 %v345, %v344
  %v466 = vpack.c.b16 %v347, %v346
  %v467 = vpack.c.b16 %v349, %v348
  %v468 = vpack.c.b16 %v351, %v350
  %v469 = vpack.c.b16 %v353, %v352
  %v470 = vpack.c.b16 %v355, %v354
  %v471 = vpack.c.b16 %v357, %v356
  %v472 = vpack.c.b16 %v359, %v358
  %v473 = vpack.c.b16 %v361, %v360
  %v474 = vpack.c.b16 %v363, %v362
  %v475 = vpack.c.b16 %v365, %v364
  %v476 = vpack.c.b16 %v367, %v366
  %v477 = vpack.c.b16 %v369, %v368
  %v478 = vpack.c.b16 %v371, %v370
  %v479 = vpack.c.b16 %v373, %v372
  %v480 = vpack.c.b16 %v375, %v374
  %v481 = vpack.c.b16 %v377, %v376
  %v482 = vpack.c.b16 %v379, %v378
  %v483 = vpack.c.b16 %v381, %v380
  %v484 = vpack.c.b16 %v383, %v382
  %v485 = vpack.c.b16 %v385, %v384
  %v486 = vpack.c.b16 %v387, %v386
  %v487 = vpack.c.b16 %v389, %v388
  %v488 = vpack.c.b16 %v391, %v390
  %v489 = vpack.c.b16 %v393, %v392
  %v490 = vpack.c.b16 %v395, %v394
  %v491 = vpack.c.b16 %v397, %v396
  %v492 = vpack.c.b16 %v399, %v398
  %v493 = vpack.c.b16 %v401, %v400
  %v494 = vpack.c.b16 %v403, %v402
  %v495 = vpack.c.b16 %v405, %v404
  %v496 = vpack.c.b16 %v407, %v406
  %v497 = vpack.c.b16 %v409, %v408
  %v498 = vpack.c.b16 %v411, %v410
  %v499 = vpack.c.b16 %v413, %v412
  %v500 = vpack.c.b16 %v415, %v414
  %v501 = vpack.c.b16 %v417, %v416
  %v502 = vpack.c.b16 %v419, %v418
  %v503 = vpack.c.b16 %v421, %v420
  %v504 = vpack.c.b16 %v423, %v422
  %v505 = vpack.c.b16 %v425, %v424
  %v506 = vpack.c.b16 %v427, %v426
  %v507 = vpack.c.b16 %v429, %v428
  %v508 = vpack.c.b16 %v431, %v430
  %v509 = vpack.c.b16 %v433, %v432
  %v510 = vpack.c.b16 %v435, %v434
  %v511 = vpack.c.b16 %v437, %v436
  %v512 = vpack.c.b16 %v439, %v438
  %v513 = vpack.c.b16 %v441, %v440
  %v514 = vpack.c.b16 %v443, %v442
  %v515 = vpack.c.b16 %v445, %v444
  %v516 = vpack.c.b16 %v447, %v446
  %v517 = vpack.c.b16 %v449, %v448
  %v518 = vpack.c.b16 %v451, %v450
  %v519 = vpack.c.b16 %v453, %v452
  %v520 = vpack.c.b16 %v455, %v454
  %v521 = vpack.c.b16 %v457, %v456
  %586 = vmatprep.subr.bf16.mxu0 0
  %587 = vmatpush1.bf16.msra.mxu0 %v458
  %588 = vmatprep.subr.bf16.mxu0 0
  %589 = vmatpush1.bf16.msra.mxu0 %v459
  %590 = vmatprep.subr.bf16.mxu0 0
  %591 = vmatpush1.bf16.msra.mxu0 %v460
  %592 = vmatprep.subr.bf16.mxu0 0
  %593 = vmatpush1.bf16.msra.mxu0 %v461
  %594 = vmatprep.subr.bf16.mxu0 0
  %595 = vmatpush1.bf16.msra.mxu0 %v462
  %596 = vmatprep.subr.bf16.mxu0 0
  %597 = vmatpush1.bf16.msra.mxu0 %v463
  %598 = vmatprep.subr.bf16.mxu0 0
  %599 = vmatpush1.bf16.msra.mxu0 %v464
  %600 = vmatprep.subr.bf16.mxu0 0
  %601 = vmatpush1.bf16.msra.mxu0 %v465
  %602 = vmatprep.subr.bf16.mxu0 0
  %603 = vmatpush1.bf16.msra.mxu0 %v466
  %604 = vmatprep.subr.bf16.mxu0 0
  %605 = vmatpush1.bf16.msra.mxu0 %v467
  %606 = vmatprep.subr.bf16.mxu0 0
  %607 = vmatpush1.bf16.msra.mxu0 %v468
  %608 = vmatprep.subr.bf16.mxu0 0
  %609 = vmatpush1.bf16.msra.mxu0 %v469
  %610 = vmatprep.subr.bf16.mxu0 0
  %611 = vmatpush1.bf16.msra.mxu0 %v470
  %612 = vmatprep.subr.bf16.mxu0 0
  %613 = vmatpush1.bf16.msra.mxu0 %v471
  %614 = vmatprep.subr.bf16.mxu0 0
  %615 = vmatpush1.bf16.msra.mxu0 %v472
  %616 = vmatprep.subr.bf16.mxu0 0
  %617 = vmatpush1.bf16.msra.mxu0 %v473
  %618 = vmatprep.mubr.bf16.mxu0 %v189
  %619 = vmatmul.mubr.bf16.gmra.mrb[0].mxu0 %v188
  %v620 = vpop.f32.mrb[0].mxu0
  %v621 = vadd.f32 %v200, %v620
  %v622 = vpop.f32.mrb[0].mxu0
  %v623 = vpop.f32.mrb[0].mxu0
  %v624 = vadd.f32 %v200, %v623
  %v625 = vpop.f32.mrb[0].mxu0
  %626 = vdwg.mxu0
  %627 = vmatprep.subr.bf16.mxu0 0
  %628 = vmatpush1.bf16.msra.mxu0 %v474
  %629 = vmatprep.subr.bf16.mxu0 0
  %630 = vmatpush1.bf16.msra.mxu0 %v475
  %631 = vmatprep.subr.bf16.mxu0 0
  %632 = vmatpush1.bf16.msra.mxu0 %v476
  %633 = vmatprep.subr.bf16.mxu0 0
  %634 = vmatpush1.bf16.msra.mxu0 %v477
  %635 = vmatprep.subr.bf16.mxu0 0
  %636 = vmatpush1.bf16.msra.mxu0 %v478
  %637 = vmatprep.subr.bf16.mxu0 0
  %638 = vmatpush1.bf16.msra.mxu0 %v479
  %639 = vmatprep.subr.bf16.mxu0 0
  %640 = vmatpush1.bf16.msra.mxu0 %v480
  %641 = vmatprep.subr.bf16.mxu0 0
  %642 = vmatpush1.bf16.msra.mxu0 %v481
  %643 = vmatprep.subr.bf16.mxu0 0
  %644 = vmatpush1.bf16.msra.mxu0 %v482
  %645 = vmatprep.subr.bf16.mxu0 0
  %646 = vmatpush1.bf16.msra.mxu0 %v483
  %647 = vmatprep.subr.bf16.mxu0 0
  %648 = vmatpush1.bf16.msra.mxu0 %v484
  %649 = vmatprep.subr.bf16.mxu0 0
  %650 = vmatpush1.bf16.msra.mxu0 %v485
  %651 = vmatprep.subr.bf16.mxu0 0
  %652 = vmatpush1.bf16.msra.mxu0 %v486
  %653 = vmatprep.subr.bf16.mxu0 0
  %654 = vmatpush1.bf16.msra.mxu0 %v487
  %655 = vmatprep.subr.bf16.mxu0 0
  %656 = vmatpush1.bf16.msra.mxu0 %v488
  %657 = vmatprep.subr.bf16.mxu0 0
  %658 = vmatpush1.bf16.msra.mxu0 %v489
  %659 = vmatprep.mubr.bf16.mxu0 %v191
  %660 = vmatmul.mubr.bf16.gmra.mrb[0].mxu0 %v190
  %v661 = vpop.f32.mrb[0].mxu0
  %v662 = vadd.f32 %v621, %v661
  %v663 = vpop.f32.mrb[0].mxu0
  %v664 = vpop.f32.mrb[0].mxu0
  %v665 = vadd.f32 %v624, %v664
  %v666 = vpop.f32.mrb[0].mxu0
  %667 = vdwg.mxu0
  %668 = vmatprep.subr.bf16.mxu0 0
  %669 = vmatpush1.bf16.msra.mxu0 %v490
  %670 = vmatprep.subr.bf16.mxu0 0
  %671 = vmatpush1.bf16.msra.mxu0 %v491
  %672 = vmatprep.subr.bf16.mxu0 0
  %673 = vmatpush1.bf16.msra.mxu0 %v492
  %674 = vmatprep.subr.bf16.mxu0 0
  %675 = vmatpush1.bf16.msra.mxu0 %v493
  %676 = vmatprep.subr.bf16.mxu0 0
  %677 = vmatpush1.bf16.msra.mxu0 %v494
  %678 = vmatprep.subr.bf16.mxu0 0
  %679 = vmatpush1.bf16.msra.mxu0 %v495
  %680 = vmatprep.subr.bf16.mxu0 0
  %681 = vmatpush1.bf16.msra.mxu0 %v496
  %682 = vmatprep.subr.bf16.mxu0 0
  %683 = vmatpush1.bf16.msra.mxu0 %v497
  %684 = vmatprep.subr.bf16.mxu0 0
  %685 = vmatpush1.bf16.msra.mxu0 %v498
  %686 = vmatprep.subr.bf16.mxu0 0
  %687 = vmatpush1.bf16.msra.mxu0 %v499
  %688 = vmatprep.subr.bf16.mxu0 0
  %689 = vmatpush1.bf16.msra.mxu0 %v500
  %690 = vmatprep.subr.bf16.mxu0 0
  %691 = vmatpush1.bf16.msra.mxu0 %v501
  %692 = vmatprep.subr.bf16.mxu0 0
  %693 = vmatpush1.bf16.msra.mxu0 %v502
  %694 = vmatprep.subr.bf16.mxu0 0
  %695 = vmatpush1.bf16.msra.mxu0 %v503
  %696 = vmatprep.subr.bf16.mxu0 0
  %697 = vmatpush1.bf16.msra.mxu0 %v504
  %698 = vmatprep.subr.bf16.mxu0 0
  %699 = vmatpush1.bf16.msra.mxu0 %v505
  %700 = vmatprep.mubr.bf16.mxu0 %v193
  %701 = vmatmul.mubr.bf16.gmra.mrb[0].mxu0 %v192
  %v702 = vpop.f32.mrb[0].mxu0
  %v703 = vadd.f32 %v662, %v702
  %v704 = vpop.f32.mrb[0].mxu0
  %v705 = vpop.f32.mrb[0].mxu0
  %v706 = vadd.f32 %v665, %v705
  %v707 = vpop.f32.mrb[0].mxu0
  %708 = vdwg.mxu0
  %709 = vmatprep.subr.bf16.mxu0 0
  %710 = vmatpush1.bf16.msra.mxu0 %v506
  %711 = vmatprep.subr.bf16.mxu0 0
  %712 = vmatpush1.bf16.msra.mxu0 %v507
  %713 = vmatprep.subr.bf16.mxu0 0
  %714 = vmatpush1.bf16.msra.mxu0 %v508
  %715 = vmatprep.subr.bf16.mxu0 0
  %716 = vmatpush1.bf16.msra.mxu0 %v509
  %717 = vmatprep.subr.bf16.mxu0 0
  %718 = vmatpush1.bf16.msra.mxu0 %v510
  %719 = vmatprep.subr.bf16.mxu0 0
  %720 = vmatpush1.bf16.msra.mxu0 %v511
  %721 = vmatprep.subr.bf16.mxu0 0
  %722 = vmatpush1.bf16.msra.mxu0 %v512
  %723 = vmatprep.subr.bf16.mxu0 0
  %724 = vmatpush1.bf16.msra.mxu0 %v513
  %725 = vmatprep.subr.bf16.mxu0 0
  %726 = vmatpush1.bf16.msra.mxu0 %v514
  %727 = vmatprep.subr.bf16.mxu0 0
  %728 = vmatpush1.bf16.msra.mxu0 %v515
  %729 = vmatprep.subr.bf16.mxu0 0
  %730 = vmatpush1.bf16.msra.mxu0 %v516
  %731 = vmatprep.subr.bf16.mxu0 0
  %732 = vmatpush1.bf16.msra.mxu0 %v517
  %733 = vmatprep.subr.bf16.mxu0 0
  %734 = vmatpush1.bf16.msra.mxu0 %v518
  %735 = vmatprep.subr.bf16.mxu0 0
  %736 = vmatpush1.bf16.msra.mxu0 %v519
  %737 = vmatprep.subr.bf16.mxu0 0
  %738 = vmatpush1.bf16.msra.mxu0 %v520
  %739 = vmatprep.subr.bf16.mxu0 0
  %740 = vmatpush1.bf16.msra.mxu0 %v521
  %741 = vmatprep.mubr.bf16.mxu0 %v195
  %742 = vmatmul.mubr.bf16.gmra.mrb[0].mxu0 %v194
  %v743 = vpop.f32.mrb[0].mxu0
  %v744 = vadd.f32 %v703, %v743
  %v745 = vpop.f32.mrb[0].mxu0
  %v746 = vpop.f32.mrb[0].mxu0
  %v747 = vadd.f32 %v706, %v746
  %v748 = vpop.f32.mrb[0].mxu0
  %749 = vdwg.mxu0
  %v750 = vmax.f32 %v744, 0.0
  %v751 = vmax.f32 %v747, 0.0
  %v752 = vpack.c.bf16 %v751, %v750
  %v754 = vlaneseq
  %v755 = vshrl.u32 %v754, 7
  %v756 = vsub.s32 0, %v755
  %v757 = vrot.slane %v171, %v756
  %v775 = vunpack.c.l.b16 %v155
  %v776 = vunpack.c.l.b16 %v156
  %v777 = vunpack.c.l.b16 %v157
  %v778 = vunpack.c.l.b16 %v158
  %v779 = vunpack.c.l.b16 %v159
  %v780 = vunpack.c.l.b16 %v160
  %v781 = vunpack.c.l.b16 %v161
  %v782 = vunpack.c.l.b16 %v162
  %v783 = vunpack.c.l.b16 %v163
  %v784 = vunpack.c.l.b16 %v164
  %v785 = vunpack.c.l.b16 %v165
  %v786 = vunpack.c.l.b16 %v166
  %v787 = vunpack.c.l.b16 %v167
  %v788 = vunpack.c.l.b16 %v168
  %v789 = vunpack.c.l.b16 %v169
  %v790 = vunpack.c.l.b16 %v170
  %v791 = vpack.c.b16 %v776, %v775
  %v792 = vpack.c.b16 %v778, %v777
  %v793 = vpack.c.b16 %v780, %v779
  %v794 = vpack.c.b16 %v782, %v781
  %v795 = vpack.c.b16 %v784, %v783
  %v796 = vpack.c.b16 %v786, %v785
  %v797 = vpack.c.b16 %v788, %v787
  %v798 = vpack.c.b16 %v790, %v789
  %807 = vmatprep.subr.bf16.mxu0 0
  %808 = vmatpush1.bf16.msra.mxu0 %v791
  %809 = vmatprep.subr.bf16.mxu0 0
  %810 = vmatpush1.bf16.msra.mxu0 %v792
  %811 = vmatprep.subr.bf16.mxu0 0
  %812 = vmatpush1.bf16.msra.mxu0 %v793
  %813 = vmatprep.subr.bf16.mxu0 0
  %814 = vmatpush1.bf16.msra.mxu0 %v794
  %815 = vmatprep.subr.bf16.mxu0 0
  %816 = vmatpush1.bf16.msra.mxu0 %v795
  %817 = vmatprep.subr.bf16.mxu0 0
  %818 = vmatpush1.bf16.msra.mxu0 %v796
  %819 = vmatprep.subr.bf16.mxu0 0
  %820 = vmatpush1.bf16.msra.mxu0 %v797
  %821 = vmatprep.subr.bf16.mxu0 0
  %822 = vmatpush1.bf16.msra.mxu0 %v798
  %823 = vmatprep.subr.bf16.mxu0 0
  %824 = vmatpush1.bf16.msra.mxu0 0
  %825 = vmatprep.subr.bf16.mxu0 0
  %826 = vmatpush1.bf16.msra.mxu0 0
  %827 = vmatprep.subr.bf16.mxu0 0
  %828 = vmatpush1.bf16.msra.mxu0 0
  %829 = vmatprep.subr.bf16.mxu0 0
  %830 = vmatpush1.bf16.msra.mxu0 0
  %831 = vmatprep.subr.bf16.mxu0 0
  %832 = vmatpush1.bf16.msra.mxu0 0
  %833 = vmatprep.subr.bf16.mxu0 0
  %834 = vmatpush1.bf16.msra.mxu0 0
  %835 = vmatprep.subr.bf16.mxu0 0
  %836 = vmatpush1.bf16.msra.mxu0 0
  %837 = vmatprep.subr.bf16.mxu0 0
  %838 = vmatpush1.bf16.msra.mxu0 0
  %839 = vmatprep.mubr.bf16.mxu0 0
  %840 = vmatmul.mubr.bf16.gmra.mrb[0].mxu0 %v752
  %v841 = vpop.f32.mrb[0].mxu0
  %v842 = vadd.f32 %v757, %v841
  %v843 = vpop.f32.mrb[0].mxu0
  %v844 = vpop.f32.mrb[0].mxu0
  %v845 = vadd.f32 %v757, %v844
  %v846 = vpop.f32.mrb[0].mxu0
  %847 = vdwg.mxu0
  %848 = vst [vmem:[%s6] sm:$0xff] %v842
  %849 = vst [vmem:[%s6 + $0x8] sm:$0xff] %v845
  %v850 = vld [vmem:[%s1] sm:$0xff]
  %v851 = vld [vmem:[%s1 + $0x8] sm:$0xff]
  %v852 = vld [vmem:[%s1 + $0x10] sm:$0xff]
  %v853 = vld [vmem:[%s1 + $0x18] sm:$0xff]
  %v854 = vld [vmem:[%s1 + $0x20] sm:$0xff]
  %v855 = vld [vmem:[%s1 + $0x28] sm:$0xff]
  %v856 = vld [vmem:[%s1 + $0x30] sm:$0xff]
  %v857 = vld [vmem:[%s1 + $0x38] sm:$0xff]
  %v858 = vld [vmem:[%s1 + $0x40] sm:$0xff]
  %v859 = vld [vmem:[%s1 + $0x48] sm:$0xff]
  %v860 = vld [vmem:[%s1 + $0x50] sm:$0xff]
  %v861 = vld [vmem:[%s1 + $0x58] sm:$0xff]
  %v862 = vld [vmem:[%s1 + $0x60] sm:$0xff]
  %v863 = vld [vmem:[%s1 + $0x68] sm:$0xff]
  %v864 = vld [vmem:[%s1 + $0x70] sm:$0xff]
  %v865 = vld [vmem:[%s1 + $0x78] sm:$0xff]
  %v866 = vpack.c.bf16 %v858, %v850
  %v867 = vpack.c.bf16 %v859, %v851
  %v868 = vpack.c.bf16 %v860, %v852
  %v869 = vpack.c.bf16 %v861, %v853
  %v870 = vpack.c.bf16 %v862, %v854
  %v871 = vpack.c.bf16 %v863, %v855
  %v872 = vpack.c.bf16 %v864, %v856
  %v873 = vpack.c.bf16 %v865, %v857
  %874 = vmatprep.subr.bf16.mxu0 0
  %875 = vmatpush1.bf16.msra.mxu0 %v458
  %876 = vmatprep.subr.bf16.mxu0 0
  %877 = vmatpush1.bf16.msra.mxu0 %v459
  %878 = vmatprep.subr.bf16.mxu0 0
  %879 = vmatpush1.bf16.msra.mxu0 %v460
  %880 = vmatprep.subr.bf16.mxu0 0
  %881 = vmatpush1.bf16.msra.mxu0 %v461
  %882 = vmatprep.subr.bf16.mxu0 0
  %883 = vmatpush1.bf16.msra.mxu0 %v462
  %884 = vmatprep.subr.bf16.mxu0 0
  %885 = vmatpush1.bf16.msra.mxu0 %v463
  %886 = vmatprep.subr.bf16.mxu0 0
  %887 = vmatpush1.bf16.msra.mxu0 %v464
  %888 = vmatprep.subr.bf16.mxu0 0
  %889 = vmatpush1.bf16.msra.mxu0 %v465
  %890 = vmatprep.subr.bf16.mxu0 0
  %891 = vmatpush1.bf16.msra.mxu0 %v466
  %892 = vmatprep.subr.bf16.mxu0 0
  %893 = vmatpush1.bf16.msra.mxu0 %v467
  %894 = vmatprep.subr.bf16.mxu0 0
  %895 = vmatpush1.bf16.msra.mxu0 %v468
  %896 = vmatprep.subr.bf16.mxu0 0
  %897 = vmatpush1.bf16.msra.mxu0 %v469
  %898 = vmatprep.subr.bf16.mxu0 0
  %899 = vmatpush1.bf16.msra.mxu0 %v470
  %900 = vmatprep.subr.bf16.mxu0 0
  %901 = vmatpush1.bf16.msra.mxu0 %v471
  %902 = vmatprep.subr.bf16.mxu0 0
  %903 = vmatpush1.bf16.msra.mxu0 %v472
  %904 = vmatprep.subr.bf16.mxu0 0
  %905 = vmatpush1.bf16.msra.mxu0 %v473
  %906 = vmatprep.mubr.bf16.mxu0 %v867
  %907 = vmatmul.mubr.bf16.gmra.mrb[0].mxu0 %v866
  %v908 = vpop.f32.mrb[0].mxu0
  %v909 = vadd.f32 %v200, %v908
  %v910 = vpop.f32.mrb[0].mxu0
  %v911 = vpop.f32.mrb[0].mxu0
  %v912 = vadd.f32 %v200, %v911
  %v913 = vpop.f32.mrb[0].mxu0
  %914 = vdwg.mxu0
  %915 = vmatprep.subr.bf16.mxu0 0
  %916 = vmatpush1.bf16.msra.mxu0 %v474
  %917 = vmatprep.subr.bf16.mxu0 0
  %918 = vmatpush1.bf16.msra.mxu0 %v475
  %919 = vmatprep.subr.bf16.mxu0 0
  %920 = vmatpush1.bf16.msra.mxu0 %v476
  %921 = vmatprep.subr.bf16.mxu0 0
  %922 = vmatpush1.bf16.msra.mxu0 %v477
  %923 = vmatprep.subr.bf16.mxu0 0
  %924 = vmatpush1.bf16.msra.mxu0 %v478
  %925 = vmatprep.subr.bf16.mxu0 0
  %926 = vmatpush1.bf16.msra.mxu0 %v479
  %927 = vmatprep.subr.bf16.mxu0 0
  %928 = vmatpush1.bf16.msra.mxu0 %v480
  %929 = vmatprep.subr.bf16.mxu0 0
  %930 = vmatpush1.bf16.msra.mxu0 %v481
  %931 = vmatprep.subr.bf16.mxu0 0
  %932 = vmatpush1.bf16.msra.mxu0 %v482
  %933 = vmatprep.subr.bf16.mxu0 0
  %934 = vmatpush1.bf16.msra.mxu0 %v483
  %935 = vmatprep.subr.bf16.mxu0 0
  %936 = vmatpush1.bf16.msra.mxu0 %v484
  %937 = vmatprep.subr.bf16.mxu0 0
  %938 = vmatpush1.bf16.msra.mxu0 %v485
  %939 = vmatprep.subr.bf16.mxu0 0
  %940 = vmatpush1.bf16.msra.mxu0 %v486
  %941 = vmatprep.subr.bf16.mxu0 0
  %942 = vmatpush1.bf16.msra.mxu0 %v487
  %943 = vmatprep.subr.bf16.mxu0 0
  %944 = vmatpush1.bf16.msra.mxu0 %v488
  %945 = vmatprep.subr.bf16.mxu0 0
  %946 = vmatpush1.bf16.msra.mxu0 %v489
  %947 = vmatprep.mubr.bf16.mxu0 %v869
  %948 = vmatmul.mubr.bf16.gmra.mrb[0].mxu0 %v868
  %v949 = vpop.f32.mrb[0].mxu0
  %v950 = vadd.f32 %v909, %v949
  %v951 = vpop.f32.mrb[0].mxu0
  %v952 = vpop.f32.mrb[0].mxu0
  %v953 = vadd.f32 %v912, %v952
  %v954 = vpop.f32.mrb[0].mxu0
  %955 = vdwg.mxu0
  %956 = vmatprep.subr.bf16.mxu0 0
  %957 = vmatpush1.bf16.msra.mxu0 %v490
  %958 = vmatprep.subr.bf16.mxu0 0
  %959 = vmatpush1.bf16.msra.mxu0 %v491
  %960 = vmatprep.subr.bf16.mxu0 0
  %961 = vmatpush1.bf16.msra.mxu0 %v492
  %962 = vmatprep.subr.bf16.mxu0 0
  %963 = vmatpush1.bf16.msra.mxu0 %v493
  %964 = vmatprep.subr.bf16.mxu0 0
  %965 = vmatpush1.bf16.msra.mxu0 %v494
  %966 = vmatprep.subr.bf16.mxu0 0
  %967 = vmatpush1.bf16.msra.mxu0 %v495
  %968 = vmatprep.subr.bf16.mxu0 0
  %969 = vmatpush1.bf16.msra.mxu0 %v496
  %970 = vmatprep.subr.bf16.mxu0 0
  %971 = vmatpush1.bf16.msra.mxu0 %v497
  %972 = vmatprep.subr.bf16.mxu0 0
  %973 = vmatpush1.bf16.msra.mxu0 %v498
  %974 = vmatprep.subr.bf16.mxu0 0
  %975 = vmatpush1.bf16.msra.mxu0 %v499
  %976 = vmatprep.subr.bf16.mxu0 0
  %977 = vmatpush1.bf16.msra.mxu0 %v500
  %978 = vmatprep.subr.bf16.mxu0 0
  %979 = vmatpush1.bf16.msra.mxu0 %v501
  %980 = vmatprep.subr.bf16.mxu0 0
  %981 = vmatpush1.bf16.msra.mxu0 %v502
  %982 = vmatprep.subr.bf16.mxu0 0
  %983 = vmatpush1.bf16.msra.mxu0 %v503
  %984 = vmatprep.subr.bf16.mxu0 0
  %985 = vmatpush1.bf16.msra.mxu0 %v504
  %986 = vmatprep.subr.bf16.mxu0 0
  %987 = vmatpush1.bf16.msra.mxu0 %v505
  %988 = vmatprep.mubr.bf16.mxu0 %v871
  %989 = vmatmul.mubr.bf16.gmra.mrb[0].mxu0 %v870
  %v990 = vpop.f32.mrb[0].mxu0
  %v991 = vadd.f32 %v950, %v990
  %v992 = vpop.f32.mrb[0].mxu0
  %v993 = vpop.f32.mrb[0].mxu0
  %v994 = vadd.f32 %v953, %v993
  %v995 = vpop.f32.mrb[0].mxu0
  %996 = vdwg.mxu0
  %997 = vmatprep.subr.bf16.mxu0 0
  %998 = vmatpush1.bf16.msra.mxu0 %v506
  %999 = vmatprep.subr.bf16.mxu0 0
  %1000 = vmatpush1.bf16.msra.mxu0 %v507
  %1001 = vmatprep.subr.bf16.mxu0 0
  %1002 = vmatpush1.bf16.msra.mxu0 %v508
  %1003 = vmatprep.subr.bf16.mxu0 0
  %1004 = vmatpush1.bf16.msra.mxu0 %v509
  %1005 = vmatprep.subr.bf16.mxu0 0
  %1006 = vmatpush1.bf16.msra.mxu0 %v510
  %1007 = vmatprep.subr.bf16.mxu0 0
  %1008 = vmatpush1.bf16.msra.mxu0 %v511
  %1009 = vmatprep.subr.bf16.mxu0 0
  %1010 = vmatpush1.bf16.msra.mxu0 %v512
  %1011 = vmatprep.subr.bf16.mxu0 0
  %1012 = vmatpush1.bf16.msra.mxu0 %v513
  %1013 = vmatprep.subr.bf16.mxu0 0
  %1014 = vmatpush1.bf16.msra.mxu0 %v514
  %1015 = vmatprep.subr.bf16.mxu0 0
  %1016 = vmatpush1.bf16.msra.mxu0 %v515
  %1017 = vmatprep.subr.bf16.mxu0 0
  %1018 = vmatpush1.bf16.msra.mxu0 %v516
  %1019 = vmatprep.subr.bf16.mxu0 0
  %1020 = vmatpush1.bf16.msra.mxu0 %v517
  %1021 = vmatprep.subr.bf16.mxu0 0
  %1022 = vmatpush1.bf16.msra.mxu0 %v518
  %1023 = vmatprep.subr.bf16.mxu0 0
  %1024 = vmatpush1.bf16.msra.mxu0 %v519
  %1025 = vmatprep.subr.bf16.mxu0 0
  %1026 = vmatpush1.bf16.msra.mxu0 %v520
  %1027 = vmatprep.subr.bf16.mxu0 0
  %1028 = vmatpush1.bf16.msra.mxu0 %v521
  %1029 = vmatprep.mubr.bf16.mxu0 %v873
  %1030 = vmatmul.mubr.bf16.gmra.mrb[0].mxu0 %v872
  %v1031 = vpop.f32.mrb[0].mxu0
  %v1032 = vadd.f32 %v991, %v1031
  %v1033 = vpop.f32.mrb[0].mxu0
  %v1034 = vpop.f32.mrb[0].mxu0
  %v1035 = vadd.f32 %v994, %v1034
  %v1036 = vpop.f32.mrb[0].mxu0
  %1037 = vdwg.mxu0
  %v1038 = vmax.f32 %v1032, 0.0
  %v1039 = vmax.f32 %v1035, 0.0
  %v1040 = vpack.c.bf16 %v1039, %v1038
  %1041 = vmatprep.subr.bf16.mxu0 0
  %1042 = vmatpush1.bf16.msra.mxu0 %v791
  %1043 = vmatprep.subr.bf16.mxu0 0
  %1044 = vmatpush1.bf16.msra.mxu0 %v792
  %1045 = vmatprep.subr.bf16.mxu0 0
  %1046 = vmatpush1.bf16.msra.mxu0 %v793
  %1047 = vmatprep.subr.bf16.mxu0 0
  %1048 = vmatpush1.bf16.msra.mxu0 %v794
  %1049 = vmatprep.subr.bf16.mxu0 0
  %1050 = vmatpush1.bf16.msra.mxu0 %v795
  %1051 = vmatprep.subr.bf16.mxu0 0
  %1052 = vmatpush1.bf16.msra.mxu0 %v796
  %1053 = vmatprep.subr.bf16.mxu0 0
  %1054 = vmatpush1.bf16.msra.mxu0 %v797
  %1055 = vmatprep.subr.bf16.mxu0 0
  %1056 = vmatpush1.bf16.msra.mxu0 %v798
  %1057 = vmatprep.subr.bf16.mxu0 0
  %1058 = vmatpush1.bf16.msra.mxu0 0
  %1059 = vmatprep.subr.bf16.mxu0 0
  %1060 = vmatpush1.bf16.msra.mxu0 0
  %1061 = vmatprep.subr.bf16.mxu0 0
  %1062 = vmatpush1.bf16.msra.mxu0 0
  %1063 = vmatprep.subr.bf16.mxu0 0
  %1064 = vmatpush1.bf16.msra.mxu0 0
  %1065 = vmatprep.subr.bf16.mxu0 0
  %1066 = vmatpush1.bf16.msra.mxu0 0
  %1067 = vmatprep.subr.bf16.mxu0 0
  %1068 = vmatpush1.bf16.msra.mxu0 0
  %1069 = vmatprep.subr.bf16.mxu0 0
  %1070 = vmatpush1.bf16.msra.mxu0 0
  %1071 = vmatprep.subr.bf16.mxu0 0
  %1072 = vmatpush1.bf16.msra.mxu0 0
  %1073 = vmatprep.mubr.bf16.mxu0 0
  %1074 = vmatmul.mubr.bf16.gmra.mrb[0].mxu0 %v1040
  %v1075 = vpop.f32.mrb[0].mxu0
  %v1076 = vadd.f32 %v757, %v1075
  %v1077 = vpop.f32.mrb[0].mxu0
  %v1078 = vpop.f32.mrb[0].mxu0
  %v1079 = vadd.f32 %v757, %v1078
  %v1080 = vpop.f32.mrb[0].mxu0
  %1081 = vdwg.mxu0
  %1082 = vst [vmem:[%s7] sm:$0xff] %v1076
  %1083 = vst [vmem:[%s7 + $0x8] sm:$0xff] %v1079
  // Predicated region
  $region26: #{mutual_net_forward.1} parent=0 // pred_check
    _
  $region27: #{mutual_net_forward.1} parent=0 // pred_check_branch
    %1085 = sbr.rel (0) target = $region29
  $region28: #{mutual_net_forward.1} parent=0 // pred_region
    _
  $region29: #{mutual_net_forward.1} parent=0 // pred_fallthru
    _
  // Predicated region
  $region30: #{mutual_net_forward.1} parent=0 // pred_check
    _
  $region31: #{mutual_net_forward.1} parent=0 // pred_check_branch
    %1087 = sbr.rel (0) target = $region33
  $region32: #{mutual_net_forward.1} parent=0 // pred_region
    _
  $region33: #{mutual_net_forward.1} parent=0 // pred_fallthru
    _
  // Predicated region
  $region34: #{mutual_net_forward.1} parent=0 // pred_check
    _
  $region35: #{mutual_net_forward.1} parent=0 // pred_check_branch
    %1089 = sbr.rel (0) target = $region37
  $region36: #{mutual_net_forward.1} parent=0 // pred_region
    _
  $region37: #{mutual_net_forward.1} parent=0 // pred_fallthru
    _
  // Predicated region
  $region38: #{mutual_net_forward.1} parent=0 // pred_check
    _
  $region39: #{mutual_net_forward.1} parent=0 // pred_check_branch
    %1091 = sbr.rel (0) target = $region41
  $region40: #{mutual_net_forward.1} parent=0 // pred_region
    _
  $region41: #{mutual_net_forward.1} parent=0 // pred_fallthru
    _

</llo_original>
